<compile_context>
chip_gen: v7x
topology: tpu7x:2x2x1
jax: 0.10.0
libtpu: 0.0.40
codegen_flags: <defaults>
</compile_context>

<pallas_src>
import functools

import jax
import jax.numpy as jnp
from jax.experimental import pallas as pl
from jax.experimental.pallas import tpu as pltpu


def _mlp_kernel(x_ref, w1_ref, w2_ref, w3_ref, oT_ref):
    # Per grid step:
    #   x  : [TB, initus] (input dtype)   w1 : [64, initus]
    #   w2 : [64, 64]                     w3 : [exitus, 64]
    #   oT : [exitus, TB]
    x = x_ref[...].astype(w1_ref.dtype)           # cast inside the kernel
    # h1 = W1 @ x.T : contract the feature axis of both operands so the
    # batch-major tile is consumed directly (no wrapper transpose of x).
    h1 = jax.lax.dot_general(
        w1_ref[...], x,
        dimension_numbers=(((1,), (1,)), ((), ())),
        preferred_element_type=jnp.float32)        # [64, TB]
    h1 = jnp.maximum(h1, 0.0)                      # relu on f32 accumulator
    h2 = jnp.dot(w2_ref[...], h1.astype(w2_ref.dtype),
                 preferred_element_type=jnp.float32)    # [64, TB]
    h2 = jnp.maximum(h2, 0.0)
    yT = jnp.dot(w3_ref[...], h2.astype(w3_ref.dtype),
                 preferred_element_type=jnp.float32)    # [exitus, TB]
    oT_ref[...] = yT.astype(oT_ref.dtype)


def _cdiv(a, b):
    return (a + b - 1) // b


def _round_up(x, m):
    return ((x + m - 1) // m) * m


def _choose_block_b(B):
    """Pick a big batch tile but keep >=2 (preferably even) grid steps."""
    TB_MAX = 8192
    if B <= 128:
        return B                       # single full-extent block (layout-legal)
    half = _cdiv(B, 2)
    # Multiple of 256 keeps every MXU N-pass full on v6e/v7x; 128 for small B.
    tb = min(TB_MAX, _round_up(half, 256 if half > 128 else 128))
    n = _cdiv(B, tb)
    if n > 2 and n % 2:                # prefer an even step count (v7x 2 TCs)
        tb2 = min(TB_MAX, _round_up(_cdiv(B, n + 1), 256))
        if _cdiv(B, tb2) % 2 == 0:
            tb = tb2
    return tb


@functools.partial(jax.jit, static_argnames=("block_b", "compute_dtype"))
def nstep_deep_sarsa_forward(x, w1, w2, w3, *, block_b=None,
                             compute_dtype=jnp.bfloat16):
    """Forward pass.

    x:  [B, initus]  batch-major input (PyTorch layout), any float dtype.
    w1: [64, initus], w2: [64, 64], w3: [exitus, 64]  -- native PyTorch
        nn.Linear [out_features, in_features] layout.
    Returns [B, exitus] float32.
    """
    B, initus = x.shape
    hidden = w1.shape[0]
    exitus = w3.shape[0]

    TB = _choose_block_b(B) if block_b is None else int(block_b)
    n_blocks = _cdiv(B, TB)

    w1c = w1.astype(compute_dtype)
    w2c = w2.astype(compute_dtype)
    w3c = w3.astype(compute_dtype)

    itemsize = jnp.dtype(compute_dtype).itemsize
    flops = 2 * B * (initus * hidden + hidden * hidden + hidden * exitus)
    bytes_accessed = (
        x.size * x.dtype.itemsize
        + (w1c.size + w2c.size + w3c.size) * itemsize
        + exitus * B * 4)

    out_T = pl.pallas_call(
        _mlp_kernel,
        out_shape=jax.ShapeDtypeStruct((exitus, B), jnp.float32),
        grid_spec=pltpu.PrefetchScalarGridSpec(
            num_scalar_prefetch=0,
            grid=(n_blocks,),
            in_specs=[
                pl.BlockSpec((TB, initus), lambda i: (i, 0)),       # x tile
                pl.BlockSpec((hidden, initus), lambda i: (0, 0)),   # W1 resident
                pl.BlockSpec((hidden, hidden), lambda i: (0, 0)),   # W2 resident
                pl.BlockSpec((exitus, hidden), lambda i: (0, 0)),   # W3 resident
            ],
            out_specs=pl.BlockSpec((exitus, TB), lambda i: (0, i)),
        ),
        compiler_params=pltpu.CompilerParams(
            dimension_semantics=("parallel",),
        ),
        cost_estimate=pl.CostEstimate(
            flops=flops, transcendentals=0, bytes_accessed=bytes_accessed),
    )(x, w1c, w2c, w3c)

    # Tiny (exitus x B) transpose back to the module's batch-major layout.
    return out_T.T


def init_params(key, initus, exitus):
    """torch.nn.Linear default init (U[-1/sqrt(fan_in), 1/sqrt(fan_in)]),
    bias=False, weights kept in PyTorch [out, in] layout."""
    k1, k2, k3 = jax.random.split(key, 3)

    def lin(k, fan_in, fan_out):
        bound = 1.0 / jnp.sqrt(jnp.float32(fan_in))
        return jax.random.uniform(k, (fan_out, fan_in), jnp.float32,
                                  -bound, bound)

    w1 = lin(k1, initus, 64)     # [64, initus]
    w2 = lin(k2, 64, 64)         # [64, 64]
    w3 = lin(k3, 64, exitus)     # [exitus, 64]
    return w1, w2, w3


def reference_forward(x, w1, w2, w3):
    h = jnp.maximum(x @ w1.T, 0.0)
    h = jnp.maximum(h @ w2.T, 0.0)
    return h @ w3.T


# TODO(synk): update()/optimizer (RMSprop), save/load, and perturb() are
# training/host utilities with no kernel equivalent; only forward() is fused.

if __name__ == "__main__":
    # Small, deterministic shapes. B deliberately not a multiple of the tile
    # to exercise the ragged last block + multi-step grid paths.
    B, initus, exitus = 300, 16, 4

    key = jax.random.PRNGKey(0)
    kx, kp = jax.random.split(key)
    x = jax.random.normal(kx, (B, initus), jnp.float32)
    w1, w2, w3 = init_params(kp, initus, exitus)

    ref = reference_forward(x, w1, w2, w3)

    # Full-precision path, auto tile (TB=256 -> grid=(2,), ragged last block).
    out_f32 = nstep_deep_sarsa_forward(x, w1, w2, w3,
                                       compute_dtype=jnp.float32)
    out_f32 = jax.block_until_ready(out_f32)
    assert out_f32.shape == (B, exitus)
    assert jnp.allclose(out_f32, ref, atol=1e-4, rtol=1e-4), \
        "f32 kernel mismatch vs reference"

    # Fast path: bf16 matmul operands, f32 accumulation; explicit TB=128
    # exercises a 3-step grid with a ragged edge.
    out_bf16 = nstep_deep_sarsa_forward(x, w1, w2, w3, block_b=128,
                                        compute_dtype=jnp.bfloat16)
    out_bf16 = jax.block_until_ready(out_bf16)
    assert out_bf16.shape == (B, exitus)
    assert jnp.allclose(out_bf16, ref, atol=5e-2, rtol=5e-2), \
        "bf16 kernel mismatch vs reference"

    print("KERNEL_OK")
</pallas_src>

<mosaic_0001>
module attributes {stable_mosaic.version = 11 : i64} {
  func.func @_mlp_kernel(%arg0: i32, %arg1: memref<256x16xf32, #tpu.memory_space<vmem>>, %arg2: memref<64x16xf32, #tpu.memory_space<vmem>>, %arg3: memref<64x64xf32, #tpu.memory_space<vmem>>, %arg4: memref<4x64xf32, #tpu.memory_space<vmem>>, %arg5: memref<4x256xf32, #tpu.memory_space<vmem>>) attributes {dimension_semantics = [#tpu.dimension_semantics<parallel>], iteration_bounds = array<i64: 2>, scalar_prefetch = 0 : i64, scratch_operands = 0 : i64, tpu.core_type = #tpu.core_type<tc>, window_params = [{transform_indices = @transform_0, window_bounds = array<i64: 256, 16>}, {pipeline_mode = #tpu.pipeline_mode<synchronous>, transform_indices = @transform_1, window_bounds = array<i64: 64, 16>}, {pipeline_mode = #tpu.pipeline_mode<synchronous>, transform_indices = @transform_2, window_bounds = array<i64: 64, 64>}, {pipeline_mode = #tpu.pipeline_mode<synchronous>, transform_indices = @transform_3, window_bounds = array<i64: 4, 64>}, {transform_indices = @transform_4, window_bounds = array<i64: 4, 256>}]} {
    %c0 = arith.constant 0 : index
    %c0_0 = arith.constant 0 : index
    %0 = vector.load %arg1[%c0, %c0_0] : memref<256x16xf32, #tpu.memory_space<vmem>>, vector<256x16xf32>
    %c0_1 = arith.constant 0 : index
    %c0_2 = arith.constant 0 : index
    %1 = vector.load %arg2[%c0_1, %c0_2] : memref<64x16xf32, #tpu.memory_space<vmem>>, vector<64x16xf32>
    %cst = arith.constant dense<0.000000e+00> : vector<64x256xf32>
    %2 = tpu.matmul %1, %0, %cst {dimension_numbers = #tpu.dot_dimension_numbers<[1], [1], [0], [0], [0, 0, 1, 0], [], []>} : vector<64x16xf32>, vector<256x16xf32>, vector<64x256xf32> -> vector<64x256xf32>
    %cst_3 = arith.constant 0.000000e+00 : f32
    %3 = vector.broadcast %cst_3 : f32 to vector<64x256xf32>
    %4 = arith.maximumf %2, %3 : vector<64x256xf32>
    %c0_4 = arith.constant 0 : index
    %c0_5 = arith.constant 0 : index
    %5 = vector.load %arg3[%c0_4, %c0_5] : memref<64x64xf32, #tpu.memory_space<vmem>>, vector<64x64xf32>
    %cst_6 = arith.constant dense<0.000000e+00> : vector<64x256xf32>
    %6 = tpu.matmul %5, %4, %cst_6 {dimension_numbers = #tpu.dot_dimension_numbers<[1], [0], [0], [1], [0, 0, 1, 1], [], []>} : vector<64x64xf32>, vector<64x256xf32>, vector<64x256xf32> -> vector<64x256xf32>
    %cst_7 = arith.constant 0.000000e+00 : f32
    %7 = vector.broadcast %cst_7 : f32 to vector<64x256xf32>
    %8 = arith.maximumf %6, %7 : vector<64x256xf32>
    %c0_8 = arith.constant 0 : index
    %c0_9 = arith.constant 0 : index
    %9 = vector.load %arg4[%c0_8, %c0_9] : memref<4x64xf32, #tpu.memory_space<vmem>>, vector<4x64xf32>
    %cst_10 = arith.constant dense<0.000000e+00> : vector<4x256xf32>
    %10 = tpu.matmul %9, %8, %cst_10 {dimension_numbers = #tpu.dot_dimension_numbers<[1], [0], [0], [1], [0, 0, 1, 1], [], []>} : vector<4x64xf32>, vector<64x256xf32>, vector<4x256xf32> -> vector<4x256xf32>
    %c0_11 = arith.constant 0 : index
    %c0_12 = arith.constant 0 : index
    %11 = vector.load %arg5[%c0_11, %c0_12] : memref<4x256xf32, #tpu.memory_space<vmem>>, vector<4x256xf32>
    tpu.vector_store %arg5[%c0_11, %c0_12], %10 {strides = array<i32>} : memref<4x256xf32, #tpu.memory_space<vmem>>, vector<4x256xf32>,
    return
  }
  func.func @transform_0(%arg0: i32) -> (i32, i32) {
    %c0_i32 = arith.constant 0 : i32
    %c0_i32_0 = arith.constant 0 : i32
    return %arg0, %c0_i32 : i32, i32
  }
  func.func @transform_1(%arg0: i32) -> (i32, i32) {
    %c0_i32 = arith.constant 0 : i32
    %c0_i32_0 = arith.constant 0 : i32
    %c0_i32_1 = arith.constant 0 : i32
    return %c0_i32, %c0_i32_0 : i32, i32
  }
  func.func @transform_2(%arg0: i32) -> (i32, i32) {
    %c0_i32 = arith.constant 0 : i32
    %c0_i32_0 = arith.constant 0 : i32
    %c0_i32_1 = arith.constant 0 : i32
    return %c0_i32, %c0_i32_0 : i32, i32
  }
  func.func @transform_3(%arg0: i32) -> (i32, i32) {
    %c0_i32 = arith.constant 0 : i32
    %c0_i32_0 = arith.constant 0 : i32
    %c0_i32_1 = arith.constant 0 : i32
    return %c0_i32, %c0_i32_0 : i32, i32
  }
  func.func @transform_4(%arg0: i32) -> (i32, i32) {
    %c0_i32 = arith.constant 0 : i32
    %c0_i32_0 = arith.constant 0 : i32
    return %c0_i32, %arg0 : i32, i32
  }
}

</mosaic_0001>

<llo_original>
// kernel: nstep_deep_sarsa_forward.1
$region0: #{nstep_deep_sarsa_forward.1}
  #allocation0 [shape = 'u32[]', space=smem, size = 0x4, offset = 0x4, fixed_abs, tag = 'smem constant byte address 0x4 - core index']
  #allocation1 [shape = 'u32[144,128]{1,0:T(1,128)}', space=vmem, size = 0x12000, scoped, tag = 'internal scratch']
  %s0 = inlined_call_operand.vmem [shape: f32[300,16], index: 0, kind: input, shape index: {}]
  %s1 = inlined_call_operand.vmem [shape: f32[64,16], index: 1, kind: input, shape index: {}]
  %s2 = inlined_call_operand.vmem [shape: f32[64,64], index: 2, kind: input, shape index: {}]
  %s3 = inlined_call_operand.vmem [shape: f32[4,64], index: 3, kind: input, shape index: {}]
  %s4 = inlined_call_operand.hbm [shape: f32[4,300], index: 4, kind: output, shape index: {}]
  %s5 = sld [smem:[#allocation0]]
  $region49: #{nstep_deep_sarsa_forward.1} parent=0
    _
  %s7 = ssub.s32 1, %s5
  %s8 = scalar_select 0, %s7, %s5
  $region1: #{nstep_deep_sarsa_forward.1} parent=0
    #allocation2 [shape = 'u8[8192]{0}', space=vmem, size = 0x2000, scoped, tag = 'output window, operand 0']
    #allocation3 [shape = 's32[2]{0}', space=sflag, size = 0x8, scoped, tag = 'scoped memory for nstep_deep_sarsa_forward.1']
    %9 = vsyncpa [#allocation3], 0
    %s10 = scalar_lea.sflag [#allocation3], 1
    %11 = vsyncpa %s10, 0
    loop: start=0, step=1, limit=4
    $region2: #{nstep_deep_sarsa_forward.1} parent=1 // loop_pre_header
      _
    $region3: #{nstep_deep_sarsa_forward.1} parent=1 // loop_header
      %s13 = sphi 0, %s17
      %p14 = scmp.ge.s32.totalorder %s13, 4
      %s23 = sphi 0, %s25
      %s26 = sphi 0, %s23
      %s27 = sphi 0, %s26
      %s43 = sphi 0, %s27
      %s47 = sphi 0, %s47
      %s49 = sphi 0, %s47
      %s50 = sphi 0, %s49
      %s64 = sphi 0, %s50
      %s68 = sphi 0, %s68
      %s70 = sphi 0, %s68
      %s71 = sphi 0, %s70
      %s85 = sphi 0, %s71
      %s89 = sphi 0, %s89
      %s91 = sphi 0, %s89
      %s92 = sphi 0, %s91
      %s106 = sphi 0, %s92
      %s112 = sphi 0, %s114
      %s115 = sphi 0, %s112
      %s116 = sphi 0, %s115
      %s132 = sphi 0, %s116
    $region4: #{nstep_deep_sarsa_forward.1} parent=1 // loop_header_branch
      %16 = sbr.rel (%p14) target = $region8
    $region5: #{nstep_deep_sarsa_forward.1} parent=1 // loop_body
      %s18 = ssub.s32 %s13, 1
      %s19 = ssub.s32 %s13, 2
      %s20 = sadd.s32 %s13, 1
      %s21 = ssub.s32 %s13, %s20
      %p22 = scmp.eq.s32.totalorder %s21, 0
      %s24 = sadd.s32 %s23, 1
      %s25 = scalar_select %p22, %s23, %s24
      %p28 = pneg %p22
      %p29 = scmp.eq.s32.totalorder %s13, 1
      %p30 = por %p28, %p29
      %p31 = scmp.ne.s32.totalorder %s23, %s26
      %p32 = scmp.eq.s32.totalorder %s13, 0
      %p33 = por %p31, %p32
      %p34 = scmp.ne.s32.totalorder %s23, %s26
      %p35 = scmp.eq.s32.totalorder %s18, 1
      %p36 = por %p34, %p35
      %p37 = scmp.ne.s32.totalorder %s26, %s27
      %p38 = scmp.eq.s32.totalorder %s18, 0
      %p39 = por %p37, %p38
      %p40 = scmp.ne.s32.totalorder %s26, %s27
      %p41 = scmp.eq.s32.totalorder %s19, 1
      %p42 = por %p40, %p41
      %p44 = scmp.ne.s32.totalorder %s27, %s43
      %p45 = scmp.eq.s32.totalorder %s19, 0
      %p46 = por %p44, %p45
      %s48 = sadd.s32 %s47, 1
      %p51 = scmp.eq.s32.totalorder %s13, 1
      %p52 = scmp.ne.s32.totalorder %s47, %s49
      %p53 = scmp.eq.s32.totalorder %s13, 0
      %p54 = por %p52, %p53
      %p55 = scmp.ne.s32.totalorder %s47, %s49
      %p56 = scmp.eq.s32.totalorder %s18, 1
      %p57 = por %p55, %p56
      %p58 = scmp.ne.s32.totalorder %s49, %s50
      %p59 = scmp.eq.s32.totalorder %s18, 0
      %p60 = por %p58, %p59
      %p61 = scmp.ne.s32.totalorder %s49, %s50
      %p62 = scmp.eq.s32.totalorder %s19, 1
      %p63 = por %p61, %p62
      %p65 = scmp.ne.s32.totalorder %s50, %s64
      %p66 = scmp.eq.s32.totalorder %s19, 0
      %p67 = por %p65, %p66
      %s69 = sadd.s32 %s68, 1
      %p72 = scmp.eq.s32.totalorder %s13, 1
      %p73 = scmp.ne.s32.totalorder %s68, %s70
      %p74 = scmp.eq.s32.totalorder %s13, 0
      %p75 = por %p73, %p74
      %p76 = scmp.ne.s32.totalorder %s68, %s70
      %p77 = scmp.eq.s32.totalorder %s18, 1
      %p78 = por %p76, %p77
      %p79 = scmp.ne.s32.totalorder %s70, %s71
      %p80 = scmp.eq.s32.totalorder %s18, 0
      %p81 = por %p79, %p80
      %p82 = scmp.ne.s32.totalorder %s70, %s71
      %p83 = scmp.eq.s32.totalorder %s19, 1
      %p84 = por %p82, %p83
      %p86 = scmp.ne.s32.totalorder %s71, %s85
      %p87 = scmp.eq.s32.totalorder %s19, 0
      %p88 = por %p86, %p87
      %s90 = sadd.s32 %s89, 1
      %p93 = scmp.eq.s32.totalorder %s13, 1
      %p94 = scmp.ne.s32.totalorder %s89, %s91
      %p95 = scmp.eq.s32.totalorder %s13, 0
      %p96 = por %p94, %p95
      %p97 = scmp.ne.s32.totalorder %s89, %s91
      %p98 = scmp.eq.s32.totalorder %s18, 1
      %p99 = por %p97, %p98
      %p100 = scmp.ne.s32.totalorder %s91, %s92
      %p101 = scmp.eq.s32.totalorder %s18, 0
      %p102 = por %p100, %p101
      %p103 = scmp.ne.s32.totalorder %s91, %s92
      %p104 = scmp.eq.s32.totalorder %s19, 1
      %p105 = por %p103, %p104
      %p107 = scmp.ne.s32.totalorder %s92, %s106
      %p108 = scmp.eq.s32.totalorder %s19, 0
      %p109 = por %p107, %p108
      %s110 = ssub.s32 %s13, %s20
      %p111 = scmp.eq.s32.totalorder %s110, 0
      %s113 = sadd.s32 %s112, 1
      %s114 = scalar_select %p111, %s112, %s113
      %p117 = pneg %p111
      %p118 = scmp.eq.s32.totalorder %s13, 1
      %p119 = por %p117, %p118
      %p120 = scmp.ne.s32.totalorder %s112, %s115
      %p121 = scmp.eq.s32.totalorder %s13, 0
      %p122 = por %p120, %p121
      %p123 = scmp.ne.s32.totalorder %s112, %s115
      %p124 = scmp.eq.s32.totalorder %s18, 1
      %p125 = por %p123, %p124
      %p126 = scmp.ne.s32.totalorder %s115, %s116
      %p127 = scmp.eq.s32.totalorder %s18, 0
      %p128 = por %p126, %p127
      %p129 = scmp.ne.s32.totalorder %s115, %s116
      %p130 = scmp.eq.s32.totalorder %s19, 1
      %p131 = por %p129, %p130
      %p133 = scmp.ne.s32.totalorder %s116, %s132
      %p134 = scmp.eq.s32.totalorder %s19, 0
      %p135 = por %p133, %p134
      %p136 = scmp.le.s32.totalorder 1, %s13
      %p137 = scmp.lt.s32.totalorder %s13, 3
      %p138 = pnand %p136, %p137
      %p139 = pneg %p138
      // Predicated region
      $region9: #{nstep_deep_sarsa_forward.1} parent=5 // pred_check
        _
      $region10: #{nstep_deep_sarsa_forward.1} parent=5 // pred_check_branch
        %141 = sbr.rel (%p138) target = $region12
      $region11: #{nstep_deep_sarsa_forward.1} parent=5 // pred_region
        %s142 = ssub.s32 %s13, 1
        // Predicated region
        $region13: #{nstep_deep_sarsa_forward.1} parent=11 // pred_check
          %p143 = pneg %p60
        $region14: #{nstep_deep_sarsa_forward.1} parent=11 // pred_check_branch
          %145 = sbr.rel (%p143) target = $region16
        $region15: #{nstep_deep_sarsa_forward.1} parent=11 // pred_region
          _
        $region16: #{nstep_deep_sarsa_forward.1} parent=11 // pred_fallthru
          _
        // Predicated region
        $region17: #{nstep_deep_sarsa_forward.1} parent=11 // pred_check
          %p146 = pneg %p81
        $region18: #{nstep_deep_sarsa_forward.1} parent=11 // pred_check_branch
          %148 = sbr.rel (%p146) target = $region20
        $region19: #{nstep_deep_sarsa_forward.1} parent=11 // pred_region
          _
        $region20: #{nstep_deep_sarsa_forward.1} parent=11 // pred_fallthru
          _
        // Predicated region
        $region21: #{nstep_deep_sarsa_forward.1} parent=11 // pred_check
          %p149 = pneg %p102
        $region22: #{nstep_deep_sarsa_forward.1} parent=11 // pred_check_branch
          %151 = sbr.rel (%p149) target = $region24
        $region23: #{nstep_deep_sarsa_forward.1} parent=11 // pred_region
          _
        $region24: #{nstep_deep_sarsa_forward.1} parent=11 // pred_fallthru
          _
      $region12: #{nstep_deep_sarsa_forward.1} parent=5 // pred_fallthru
        _
      %p152 = scmp.lt.s32.totalorder %s13, 2
      // Predicated region
      $region25: #{nstep_deep_sarsa_forward.1} parent=5 // pred_check
        %p153 = pneg %p152
      $region26: #{nstep_deep_sarsa_forward.1} parent=5 // pred_check_branch
        %155 = sbr.rel (%p153) target = $region28
      $region27: #{nstep_deep_sarsa_forward.1} parent=5 // pred_region
        // Predicated region
        $region29: #{nstep_deep_sarsa_forward.1} parent=27 // pred_check
          %p156 = pneg %p33
        $region30: #{nstep_deep_sarsa_forward.1} parent=27 // pred_check_branch
          %158 = sbr.rel (%p156) target = $region32
        $region31: #{nstep_deep_sarsa_forward.1} parent=27 // pred_region
          %s159 = smul.u32 32, %s13
          %s160 = ssub.s32 38, %s159
          %p161 = scmp.lt.s32.totalorder %s160, 32
          %s162 = scalar_select %p161, %s160, 32
          %s163 = smul.u32 128, %s162
          %p164 = scmp.lt.s32.totalorder %s159, 37
          %s165 = scalar_select %p164, %s159, 37
          %s166 = smul.addr %s165, 8
          %s167 = scalar_lea.vmem %s0, %s166
          %s168 = smul.u32 32, %s13
          %s169 = ssub.s32 38, %s168
          %p170 = scmp.lt.s32.totalorder %s169, 32
          %s171 = scalar_select %p170, %s169, 32
          %s172 = smul.u32 128, %s171
        $region32: #{nstep_deep_sarsa_forward.1} parent=27 // pred_fallthru
          _
      $region28: #{nstep_deep_sarsa_forward.1} parent=5 // pred_fallthru
        _
      %p173 = scmp.le.s32.totalorder 1, %s13
      %p174 = scmp.lt.s32.totalorder %s13, 3
      %p175 = pnand %p173, %p174
      %p176 = pneg %p175
      // Predicated region
      $region33: #{nstep_deep_sarsa_forward.1} parent=5 // pred_check
        _
      $region34: #{nstep_deep_sarsa_forward.1} parent=5 // pred_check_branch
        %178 = sbr.rel (%p175) target = $region36
      $region35: #{nstep_deep_sarsa_forward.1} parent=5 // pred_region
        %s179 = ssub.s32 %s13, 1
        %s180 = smul.u32 32, %s18
        %s181 = ssub.s32 38, %s180
        %p182 = scmp.lt.s32.totalorder %s181, 32
        %s183 = scalar_select %p182, %s181, 32
        %s184 = smul.u32 128, %s183
        %p185 = scmp.lt.s32.totalorder %s180, 37
        %s186 = scalar_select %p185, %s180, 37
        %s187 = smul.addr %s186, 8
        %s188 = scalar_lea.vmem %s0, %s187
        %p189 = pneg %p39
        %p190 = pneg %p36
        %p191 = pneg %p60
        %p192 = pneg %p57
        %p193 = pneg %p81
        %p194 = pneg %p78
        %p195 = pneg %p102
        %p196 = pneg %p99
        %p197 = pneg %p128
        %p198 = pneg %p125
        %s199 = sand.u32 %s115, 1
        %s200 = scalar_lea.sflag [#allocation3], %s199
        %s201 = sand.u32 %s115, 1
        %s202 = smul.addr %s201, 8
        %s203 = scalar_lea.vmem [#allocation2], %s202
        %s204 = smul.u32 32, %s18
        %s205 = ssub.s32 38, %s204
        %p206 = scmp.lt.s32.totalorder %s205, 32
        %s207 = scalar_select %p206, %s205, 32
        %s208 = smul.u32 128, %s207
        %p209 = scmp.lt.s32.totalorder %s204, 37
        %s210 = scalar_select %p209, %s204, 37
        %s211 = smul.addr %s210, 8
        %s212 = scalar_lea.vmem %s0, %s211
        %s213 = smul.u32 32, %s18
        %s214 = ssub.s32 38, %s213
        %p215 = scmp.lt.s32.totalorder %s214, 32
        %s216 = scalar_select %p215, %s214, 32
        %s217 = smul.u32 128, %s216
        %s218 = smul.u32 2, %s18
        %s219 = ssub.s32 3, %s218
        %p220 = scmp.lt.s32.totalorder %s219, 2
        %s221 = scalar_select %p220, %s219, 2
        %s222 = smul.u32 64, %s221
        %v223 = vld [vmem:[%s212] sm:$0xff]
        %v224 = vld [vmem:[%s212 + $0x8] sm:$0xff]
        %v225 = vld [vmem:[%s212 + $0x10] sm:$0xff]
        %v226 = vld [vmem:[%s212 + $0x18] sm:$0xff]
        %v227 = vld [vmem:[%s212 + $0x20] sm:$0xff]
        %v228 = vld [vmem:[%s212 + $0x28] sm:$0xff]
        %v229 = vld [vmem:[%s212 + $0x30] sm:$0xff]
        %v230 = vld [vmem:[%s212 + $0x38] sm:$0xff]
        %v231 = vld [vmem:[%s212 + $0x40] sm:$0xff]
        %v232 = vld [vmem:[%s212 + $0x48] sm:$0xff]
        %v233 = vld [vmem:[%s212 + $0x50] sm:$0xff]
        %v234 = vld [vmem:[%s212 + $0x58] sm:$0xff]
        %v235 = vld [vmem:[%s212 + $0x60] sm:$0xff]
        %v236 = vld [vmem:[%s212 + $0x68] sm:$0xff]
        %v237 = vld [vmem:[%s212 + $0x70] sm:$0xff]
        %v238 = vld [vmem:[%s212 + $0x78] sm:$0xff]
        %v239 = vld [vmem:[%s212 + $0x80] sm:$0xff]
        %v240 = vld [vmem:[%s212 + $0x88] sm:$0xff]
        %v241 = vld [vmem:[%s212 + $0x90] sm:$0xff]
        %v242 = vld [vmem:[%s212 + $0x98] sm:$0xff]
        %v243 = vld [vmem:[%s212 + $0xa0] sm:$0xff]
        %v244 = vld [vmem:[%s212 + $0xa8] sm:$0xff]
        %v245 = vld [vmem:[%s212 + $0xb0] sm:$0xff]
        %v246 = vld [vmem:[%s212 + $0xb8] sm:$0xff]
        %v247 = vld [vmem:[%s212 + $0xc0] sm:$0xff]
        %v248 = vld [vmem:[%s212 + $0xc8] sm:$0xff]
        %v249 = vld [vmem:[%s212 + $0xd0] sm:$0xff]
        %v250 = vld [vmem:[%s212 + $0xd8] sm:$0xff]
        %v251 = vld [vmem:[%s212 + $0xe0] sm:$0xff]
        %v252 = vld [vmem:[%s212 + $0xe8] sm:$0xff]
        %v253 = vld [vmem:[%s212 + $0xf0] sm:$0xff]
        %v254 = vld [vmem:[%s212 + $0xf8] sm:$0xff]
        %v255 = vld [vmem:[%s1] sm:$0xff]
        %v256 = vld [vmem:[%s1 + $0x8] sm:$0xff]
        %v257 = vld [vmem:[%s1 + $0x10] sm:$0xff]
        %v258 = vld [vmem:[%s1 + $0x18] sm:$0xff]
        %v259 = vld [vmem:[%s1 + $0x20] sm:$0xff]
        %v260 = vld [vmem:[%s1 + $0x28] sm:$0xff]
        %v261 = vld [vmem:[%s1 + $0x30] sm:$0xff]
        %v262 = vld [vmem:[%s1 + $0x38] sm:$0xff]
        %vm263 = vcmask 130048
        %v265 = vsel %vm263, %v255, 0
        %v268 = vsel %vm263, %v256, 0
        %v271 = vsel %vm263, %v257, 0
        %v274 = vsel %vm263, %v258, 0
        %v277 = vsel %vm263, %v259, 0
        %v280 = vsel %vm263, %v260, 0
        %v283 = vsel %vm263, %v261, 0
        %v286 = vsel %vm263, %v262, 0
        %v289 = vsel %vm263, %v223, 0
        %v292 = vsel %vm263, %v224, 0
        %v295 = vsel %vm263, %v225, 0
        %v298 = vsel %vm263, %v226, 0
        %v301 = vsel %vm263, %v227, 0
        %v304 = vsel %vm263, %v228, 0
        %v307 = vsel %vm263, %v229, 0
        %v310 = vsel %vm263, %v230, 0
        %v313 = vsel %vm263, %v231, 0
        %v316 = vsel %vm263, %v232, 0
        %v319 = vsel %vm263, %v233, 0
        %v322 = vsel %vm263, %v234, 0
        %v325 = vsel %vm263, %v235, 0
        %v328 = vsel %vm263, %v236, 0
        %v331 = vsel %vm263, %v237, 0
        %v334 = vsel %vm263, %v238, 0
        %v337 = vsel %vm263, %v239, 0
        %v340 = vsel %vm263, %v240, 0
        %v343 = vsel %vm263, %v241, 0
        %v346 = vsel %vm263, %v242, 0
        %v349 = vsel %vm263, %v243, 0
        %v352 = vsel %vm263, %v244, 0
        %v355 = vsel %vm263, %v245, 0
        %v358 = vsel %vm263, %v246, 0
        %v361 = vsel %vm263, %v247, 0
        %v364 = vsel %vm263, %v248, 0
        %v367 = vsel %vm263, %v249, 0
        %v370 = vsel %vm263, %v250, 0
        %v373 = vsel %vm263, %v251, 0
        %v376 = vsel %vm263, %v252, 0
        %v379 = vsel %vm263, %v253, 0
        %v382 = vsel %vm263, %v254, 0
        %384 = vmatprep.subr.mxu0 0.0
        %385 = vmatpush1.xpose.msra.mxu0 %v289
        %386 = vmatprep.subr.mxu0 0.0
        %387 = vmatpush1.xpose.msra.mxu0 %v292
        %388 = vmatprep.subr.mxu0 0.0
        %389 = vmatpush1.xpose.msra.mxu0 %v295
        %390 = vmatprep.subr.mxu0 0.0
        %391 = vmatpush1.xpose.msra.mxu0 %v298
        %392 = vmatprep.subr.mxu0 0.0
        %393 = vmatpush1.xpose.msra.mxu0 %v301
        %394 = vmatprep.subr.mxu0 0.0
        %395 = vmatpush1.xpose.msra.mxu0 %v304
        %396 = vmatprep.subr.mxu0 0.0
        %397 = vmatpush1.xpose.msra.mxu0 %v307
        %398 = vmatprep.subr.mxu0 0.0
        %399 = vmatpush1.xpose.msra.mxu0 %v310
        %400 = vmatprep.subr.mxu0 0.0
        %401 = vmatpush1.xpose.msra.mxu0 %v313
        %402 = vmatprep.subr.mxu0 0.0
        %403 = vmatpush1.xpose.msra.mxu0 %v316
        %404 = vmatprep.subr.mxu0 0.0
        %405 = vmatpush1.xpose.msra.mxu0 %v319
        %406 = vmatprep.subr.mxu0 0.0
        %407 = vmatpush1.xpose.msra.mxu0 %v322
        %408 = vmatprep.subr.mxu0 0.0
        %409 = vmatpush1.xpose.msra.mxu0 %v325
        %410 = vmatprep.subr.mxu0 0.0
        %411 = vmatpush1.xpose.msra.mxu0 %v328
        %412 = vmatprep.subr.mxu0 0.0
        %413 = vmatpush1.xpose.msra.mxu0 %v331
        %414 = vmatprep.subr.mxu0 0.0
        %415 = vmatpush1.xpose.msra.mxu0 %v334
        %416 = vmatprep.subr.mxu0 0.0
        %417 = vmatpush1.xpose.msra.mxu0 %v337
        %418 = vmatprep.subr.mxu0 0.0
        %419 = vmatpush1.xpose.msra.mxu0 %v340
        %420 = vmatprep.subr.mxu0 0.0
        %421 = vmatpush1.xpose.msra.mxu0 %v343
        %422 = vmatprep.subr.mxu0 0.0
        %423 = vmatpush1.xpose.msra.mxu0 %v346
        %424 = vmatprep.subr.mxu0 0.0
        %425 = vmatpush1.xpose.msra.mxu0 %v349
        %426 = vmatprep.subr.mxu0 0.0
        %427 = vmatpush1.xpose.msra.mxu0 %v352
        %428 = vmatprep.subr.mxu0 0.0
        %429 = vmatpush1.xpose.msra.mxu0 %v355
        %430 = vmatprep.subr.mxu0 0.0
        %431 = vmatpush1.xpose.msra.mxu0 %v358
        %432 = vmatprep.subr.mxu0 0.0
        %433 = vmatpush1.xpose.msra.mxu0 %v361
        %434 = vmatprep.subr.mxu0 0.0
        %435 = vmatpush1.xpose.msra.mxu0 %v364
        %436 = vmatprep.subr.mxu0 0.0
        %437 = vmatpush1.xpose.msra.mxu0 %v367
        %438 = vmatprep.subr.mxu0 0.0
        %439 = vmatpush1.xpose.msra.mxu0 %v370
        %440 = vmatprep.subr.mxu0 0.0
        %441 = vmatpush1.xpose.msra.mxu0 %v373
        %442 = vmatprep.subr.mxu0 0.0
        %443 = vmatpush1.xpose.msra.mxu0 %v376
        %444 = vmatprep.subr.mxu0 0.0
        %445 = vmatpush1.xpose.msra.mxu0 %v379
        %446 = vmatprep.subr.mxu0 0.0
        %447 = vmatpush1.xpose.msra.mxu0 %v382
        %448 = vmatprep.mubr.f32.mxu0 0.0
        %449 = vmatmul.mubr.f32.gmra.mrb[0].mxu0 %v265
        %v450 = vpop.f32.mrb[0].mxu0
        %v451 = vadd.f32 0.0, %v450
        %v452 = vpop.f32.mrb[0].mxu0
        %v453 = vadd.f32 0.0, %v452
        %454 = vmatprep.mubr.f32.mxu0 0.0
        %455 = vmatmul.mubr.f32.gmra.mrb[0].mxu0 %v268
        %v456 = vpop.f32.mrb[0].mxu0
        %v457 = vadd.f32 0.0, %v456
        %v458 = vpop.f32.mrb[0].mxu0
        %v459 = vadd.f32 0.0, %v458
        %460 = vmatprep.mubr.f32.mxu0 0.0
        %461 = vmatmul.mubr.f32.gmra.mrb[0].mxu0 %v271
        %v462 = vpop.f32.mrb[0].mxu0
        %v463 = vadd.f32 0.0, %v462
        %v464 = vpop.f32.mrb[0].mxu0
        %v465 = vadd.f32 0.0, %v464
        %466 = vmatprep.mubr.f32.mxu0 0.0
        %467 = vmatmul.mubr.f32.gmra.mrb[0].mxu0 %v274
        %v468 = vpop.f32.mrb[0].mxu0
        %v469 = vadd.f32 0.0, %v468
        %v470 = vpop.f32.mrb[0].mxu0
        %v471 = vadd.f32 0.0, %v470
        %472 = vmatprep.mubr.f32.mxu0 0.0
        %473 = vmatmul.mubr.f32.gmra.mrb[0].mxu0 %v277
        %v474 = vpop.f32.mrb[0].mxu0
        %v475 = vadd.f32 0.0, %v474
        %v476 = vpop.f32.mrb[0].mxu0
        %v477 = vadd.f32 0.0, %v476
        %478 = vmatprep.mubr.f32.mxu0 0.0
        %479 = vmatmul.mubr.f32.gmra.mrb[0].mxu0 %v280
        %v480 = vpop.f32.mrb[0].mxu0
        %v481 = vadd.f32 0.0, %v480
        %v482 = vpop.f32.mrb[0].mxu0
        %v483 = vadd.f32 0.0, %v482
        %484 = vmatprep.mubr.f32.mxu0 0.0
        %485 = vmatmul.mubr.f32.gmra.mrb[0].mxu0 %v283
        %v486 = vpop.f32.mrb[0].mxu0
        %v487 = vadd.f32 0.0, %v486
        %v488 = vpop.f32.mrb[0].mxu0
        %v489 = vadd.f32 0.0, %v488
        %490 = vmatprep.mubr.f32.mxu0 0.0
        %491 = vmatmul.mubr.f32.gmra.mrb[0].mxu0 %v286
        %v492 = vpop.f32.mrb[0].mxu0
        %v493 = vadd.f32 0.0, %v492
        %v494 = vpop.f32.mrb[0].mxu0
        %v495 = vadd.f32 0.0, %v494
        %496 = vdwg.mxu0
        %v497 = vmax.f32 %v451, 0.0
        %v498 = vmax.f32 %v453, 0.0
        %v499 = vmax.f32 %v457, 0.0
        %v500 = vmax.f32 %v459, 0.0
        %v501 = vmax.f32 %v463, 0.0
        %v502 = vmax.f32 %v465, 0.0
        %v503 = vmax.f32 %v469, 0.0
        %v504 = vmax.f32 %v471, 0.0
        %v505 = vmax.f32 %v475, 0.0
        %v506 = vmax.f32 %v477, 0.0
        %v507 = vmax.f32 %v481, 0.0
        %v508 = vmax.f32 %v483, 0.0
        %v509 = vmax.f32 %v487, 0.0
        %v510 = vmax.f32 %v489, 0.0
        %v511 = vmax.f32 %v493, 0.0
        %v512 = vmax.f32 %v495, 0.0
        %v513 = vld [vmem:[%s2] sm:$0xff]
        %v514 = vld [vmem:[%s2 + $0x8] sm:$0xff]
        %v515 = vld [vmem:[%s2 + $0x10] sm:$0xff]
        %v516 = vld [vmem:[%s2 + $0x18] sm:$0xff]
        %v517 = vld [vmem:[%s2 + $0x20] sm:$0xff]
        %v518 = vld [vmem:[%s2 + $0x28] sm:$0xff]
        %v519 = vld [vmem:[%s2 + $0x30] sm:$0xff]
        %v520 = vld [vmem:[%s2 + $0x38] sm:$0xff]
        %vm521 = vcmask 523264
        %v523 = vsel %vm521, %v513, 0
        %v526 = vsel %vm521, %v514, 0
        %v529 = vsel %vm521, %v515, 0
        %v532 = vsel %vm521, %v516, 0
        %v535 = vsel %vm521, %v517, 0
        %v538 = vsel %vm521, %v518, 0
        %v541 = vsel %vm521, %v519, 0
        %v544 = vsel %vm521, %v520, 0
        %546 = vmatprep.subr.mxu0 %v498
        %547 = vmatpush1.msra.mxu0 %v497
        %548 = vmatprep.subr.mxu0 %v500
        %549 = vmatpush1.msra.mxu0 %v499
        %550 = vmatprep.subr.mxu0 %v502
        %551 = vmatpush1.msra.mxu0 %v501
        %552 = vmatprep.subr.mxu0 %v504
        %553 = vmatpush1.msra.mxu0 %v503
        %554 = vmatprep.subr.mxu0 %v506
        %555 = vmatpush1.msra.mxu0 %v505
        %556 = vmatprep.subr.mxu0 %v508
        %557 = vmatpush1.msra.mxu0 %v507
        %558 = vmatprep.subr.mxu0 %v510
        %559 = vmatpush1.msra.mxu0 %v509
        %560 = vmatprep.subr.mxu0 %v512
        %561 = vmatpush1.msra.mxu0 %v511
        %562 = vmatprep.subr.mxu0 0.0
        %563 = vmatpush1.msra.mxu0 0.0
        %564 = vmatprep.subr.mxu0 0.0
        %565 = vmatpush1.msra.mxu0 0.0
        %566 = vmatprep.subr.mxu0 0.0
        %567 = vmatpush1.msra.mxu0 0.0
        %568 = vmatprep.subr.mxu0 0.0
        %569 = vmatpush1.msra.mxu0 0.0
        %570 = vmatprep.subr.mxu0 0.0
        %571 = vmatpush1.msra.mxu0 0.0
        %572 = vmatprep.subr.mxu0 0.0
        %573 = vmatpush1.msra.mxu0 0.0
        %574 = vmatprep.subr.mxu0 0.0
        %575 = vmatpush1.msra.mxu0 0.0
        %576 = vmatprep.subr.mxu0 0.0
        %577 = vmatpush1.msra.mxu0 0.0
        %578 = vmatprep.subr.mxu0 0.0
        %579 = vmatpush1.msra.mxu0 0.0
        %580 = vmatprep.subr.mxu0 0.0
        %581 = vmatpush1.msra.mxu0 0.0
        %582 = vmatprep.subr.mxu0 0.0
        %583 = vmatpush1.msra.mxu0 0.0
        %584 = vmatprep.subr.mxu0 0.0
        %585 = vmatpush1.msra.mxu0 0.0
        %586 = vmatprep.subr.mxu0 0.0
        %587 = vmatpush1.msra.mxu0 0.0
        %588 = vmatprep.subr.mxu0 0.0
        %589 = vmatpush1.msra.mxu0 0.0
        %590 = vmatprep.subr.mxu0 0.0
        %591 = vmatpush1.msra.mxu0 0.0
        %592 = vmatprep.subr.mxu0 0.0
        %593 = vmatpush1.msra.mxu0 0.0
        %594 = vmatprep.subr.mxu0 0.0
        %595 = vmatpush1.msra.mxu0 0.0
        %596 = vmatprep.subr.mxu0 0.0
        %597 = vmatpush1.msra.mxu0 0.0
        %598 = vmatprep.subr.mxu0 0.0
        %599 = vmatpush1.msra.mxu0 0.0
        %600 = vmatprep.subr.mxu0 0.0
        %601 = vmatpush1.msra.mxu0 0.0
        %602 = vmatprep.subr.mxu0 0.0
        %603 = vmatpush1.msra.mxu0 0.0
        %604 = vmatprep.subr.mxu0 0.0
        %605 = vmatpush1.msra.mxu0 0.0
        %606 = vmatprep.subr.mxu0 0.0
        %607 = vmatpush1.msra.mxu0 0.0
        %608 = vmatprep.subr.mxu0 0.0
        %609 = vmatpush1.msra.mxu0 0.0
        %610 = vmatprep.mubr.f32.mxu0 0.0
        %611 = vmatmul.mubr.f32.gmra.mrb[0].mxu0 %v523
        %v612 = vpop.f32.mrb[0].mxu0
        %v613 = vadd.f32 0.0, %v612
        %v614 = vpop.f32.mrb[0].mxu0
        %v615 = vadd.f32 0.0, %v614
        %616 = vmatprep.mubr.f32.mxu0 0.0
        %617 = vmatmul.mubr.f32.gmra.mrb[0].mxu0 %v526
        %v618 = vpop.f32.mrb[0].mxu0
        %v619 = vadd.f32 0.0, %v618
        %v620 = vpop.f32.mrb[0].mxu0
        %v621 = vadd.f32 0.0, %v620
        %622 = vmatprep.mubr.f32.mxu0 0.0
        %623 = vmatmul.mubr.f32.gmra.mrb[0].mxu0 %v529
        %v624 = vpop.f32.mrb[0].mxu0
        %v625 = vadd.f32 0.0, %v624
        %v626 = vpop.f32.mrb[0].mxu0
        %v627 = vadd.f32 0.0, %v626
        %628 = vmatprep.mubr.f32.mxu0 0.0
        %629 = vmatmul.mubr.f32.gmra.mrb[0].mxu0 %v532
        %v630 = vpop.f32.mrb[0].mxu0
        %v631 = vadd.f32 0.0, %v630
        %v632 = vpop.f32.mrb[0].mxu0
        %v633 = vadd.f32 0.0, %v632
        %634 = vmatprep.mubr.f32.mxu0 0.0
        %635 = vmatmul.mubr.f32.gmra.mrb[0].mxu0 %v535
        %v636 = vpop.f32.mrb[0].mxu0
        %v637 = vadd.f32 0.0, %v636
        %v638 = vpop.f32.mrb[0].mxu0
        %v639 = vadd.f32 0.0, %v638
        %640 = vmatprep.mubr.f32.mxu0 0.0
        %641 = vmatmul.mubr.f32.gmra.mrb[0].mxu0 %v538
        %v642 = vpop.f32.mrb[0].mxu0
        %v643 = vadd.f32 0.0, %v642
        %v644 = vpop.f32.mrb[0].mxu0
        %v645 = vadd.f32 0.0, %v644
        %646 = vmatprep.mubr.f32.mxu0 0.0
        %647 = vmatmul.mubr.f32.gmra.mrb[0].mxu0 %v541
        %v648 = vpop.f32.mrb[0].mxu0
        %v649 = vadd.f32 0.0, %v648
        %v650 = vpop.f32.mrb[0].mxu0
        %v651 = vadd.f32 0.0, %v650
        %652 = vmatprep.mubr.f32.mxu0 0.0
        %653 = vmatmul.mubr.f32.gmra.mrb[0].mxu0 %v544
        %v654 = vpop.f32.mrb[0].mxu0
        %v655 = vadd.f32 0.0, %v654
        %v656 = vpop.f32.mrb[0].mxu0
        %v657 = vadd.f32 0.0, %v656
        %658 = vdwg.mxu0
        %v659 = vmax.f32 %v613, 0.0
        %v660 = vmax.f32 %v615, 0.0
        %v661 = vmax.f32 %v619, 0.0
        %v662 = vmax.f32 %v621, 0.0
        %v663 = vmax.f32 %v625, 0.0
        %v664 = vmax.f32 %v627, 0.0
        %v665 = vmax.f32 %v631, 0.0
        %v666 = vmax.f32 %v633, 0.0
        %v667 = vmax.f32 %v637, 0.0
        %v668 = vmax.f32 %v639, 0.0
        %v669 = vmax.f32 %v643, 0.0
        %v670 = vmax.f32 %v645, 0.0
        %v671 = vmax.f32 %v649, 0.0
        %v672 = vmax.f32 %v651, 0.0
        %v673 = vmax.f32 %v655, 0.0
        %v674 = vmax.f32 %v657, 0.0
        %v675 = vld [vmem:[%s3] sm:$0xf]
        %v677 = vsel %vm521, %v675, 0
        %679 = vmatprep.subr.mxu0 %v660
        %680 = vmatpush1.msra.mxu0 %v659
        %681 = vmatprep.subr.mxu0 %v662
        %682 = vmatpush1.msra.mxu0 %v661
        %683 = vmatprep.subr.mxu0 %v664
        %684 = vmatpush1.msra.mxu0 %v663
        %685 = vmatprep.subr.mxu0 %v666
        %686 = vmatpush1.msra.mxu0 %v665
        %687 = vmatprep.subr.mxu0 %v668
        %688 = vmatpush1.msra.mxu0 %v667
        %689 = vmatprep.subr.mxu0 %v670
        %690 = vmatpush1.msra.mxu0 %v669
        %691 = vmatprep.subr.mxu0 %v672
        %692 = vmatpush1.msra.mxu0 %v671
        %693 = vmatprep.subr.mxu0 %v674
        %694 = vmatpush1.msra.mxu0 %v673
        %695 = vmatprep.subr.mxu0 0.0
        %696 = vmatpush1.msra.mxu0 0.0
        %697 = vmatprep.subr.mxu0 0.0
        %698 = vmatpush1.msra.mxu0 0.0
        %699 = vmatprep.subr.mxu0 0.0
        %700 = vmatpush1.msra.mxu0 0.0
        %701 = vmatprep.subr.mxu0 0.0
        %702 = vmatpush1.msra.mxu0 0.0
        %703 = vmatprep.subr.mxu0 0.0
        %704 = vmatpush1.msra.mxu0 0.0
        %705 = vmatprep.subr.mxu0 0.0
        %706 = vmatpush1.msra.mxu0 0.0
        %707 = vmatprep.subr.mxu0 0.0
        %708 = vmatpush1.msra.mxu0 0.0
        %709 = vmatprep.subr.mxu0 0.0
        %710 = vmatpush1.msra.mxu0 0.0
        %711 = vmatprep.subr.mxu0 0.0
        %712 = vmatpush1.msra.mxu0 0.0
        %713 = vmatprep.subr.mxu0 0.0
        %714 = vmatpush1.msra.mxu0 0.0
        %715 = vmatprep.subr.mxu0 0.0
        %716 = vmatpush1.msra.mxu0 0.0
        %717 = vmatprep.subr.mxu0 0.0
        %718 = vmatpush1.msra.mxu0 0.0
        %719 = vmatprep.subr.mxu0 0.0
        %720 = vmatpush1.msra.mxu0 0.0
        %721 = vmatprep.subr.mxu0 0.0
        %722 = vmatpush1.msra.mxu0 0.0
        %723 = vmatprep.subr.mxu0 0.0
        %724 = vmatpush1.msra.mxu0 0.0
        %725 = vmatprep.subr.mxu0 0.0
        %726 = vmatpush1.msra.mxu0 0.0
        %727 = vmatprep.subr.mxu0 0.0
        %728 = vmatpush1.msra.mxu0 0.0
        %729 = vmatprep.subr.mxu0 0.0
        %730 = vmatpush1.msra.mxu0 0.0
        %731 = vmatprep.subr.mxu0 0.0
        %732 = vmatpush1.msra.mxu0 0.0
        %733 = vmatprep.subr.mxu0 0.0
        %734 = vmatpush1.msra.mxu0 0.0
        %735 = vmatprep.subr.mxu0 0.0
        %736 = vmatpush1.msra.mxu0 0.0
        %737 = vmatprep.subr.mxu0 0.0
        %738 = vmatpush1.msra.mxu0 0.0
        %739 = vmatprep.subr.mxu0 0.0
        %740 = vmatpush1.msra.mxu0 0.0
        %741 = vmatprep.subr.mxu0 0.0
        %742 = vmatpush1.msra.mxu0 0.0
        %743 = vmatprep.mubr.f32.mxu0 0.0
        %744 = vmatmul.mubr.f32.gmra.mrb[0].mxu0 %v677
        %v745 = vpop.f32.mrb[0].mxu0
        %v746 = vadd.f32 0.0, %v745
        %v747 = vpop.f32.mrb[0].mxu0
        %v748 = vadd.f32 0.0, %v747
        %749 = vdwg.mxu0
        %v752 = vcombine.low %v746, %v748
        %754 = vst [vmem:[%s203] sm:$0xff] %v752
        %s755 = sand.u32 %s115, 1
        %s756 = scalar_lea.sflag [#allocation3], %s755
        %s757 = sand.u32 %s115, 1
        %s758 = smul.addr %s757, 8
        %s759 = scalar_lea.vmem [#allocation2], %s758
        // Predicated region
        $region37: #{nstep_deep_sarsa_forward.1} parent=35 // pred_check
          %p760 = pneg %p125
        $region38: #{nstep_deep_sarsa_forward.1} parent=35 // pred_check_branch
          %762 = sbr.rel (%p760) target = $region40
        $region39: #{nstep_deep_sarsa_forward.1} parent=35 // pred_region
          %s763 = smul.u32 2, %s18
          %s764 = ssub.s32 3, %s763
          %p765 = scmp.lt.s32.totalorder %s764, 2
          %s766 = scalar_select %p765, %s764, 2
          %s767 = smul.u32 64, %s766
          %s769 = ssub.s32 128, %s767
          %770 = vsyncadd %s756, %s769
          %p771 = scmp.ne.s32.totalorder 0, %s767
          %s772 = smul.addr %s763, 64
          %s773 = scalar_lea.hbm %s4, %s772
          %s774 = smul.u32 %s766, 4
          %s775 = sshll.u32 %s774, 4
          %s776 = sshll.u32 %s759, 4
          %s777 = int_to_ptr.vmem [resolvable:$true] %s776
          %779 = dma.vmem_to_hbm [thread:$0]  (%p771), %s777, %s775, %s773, %s756
        $region40: #{nstep_deep_sarsa_forward.1} parent=35 // pred_fallthru
          _
      $region36: #{nstep_deep_sarsa_forward.1} parent=5 // pred_fallthru
        _
      %p780 = scmp.le.s32.totalorder 2, %s13
      // Predicated region
      $region41: #{nstep_deep_sarsa_forward.1} parent=5 // pred_check
        %p781 = pneg %p780
      $region42: #{nstep_deep_sarsa_forward.1} parent=5 // pred_check_branch
        %783 = sbr.rel (%p781) target = $region44
      $region43: #{nstep_deep_sarsa_forward.1} parent=5 // pred_region
        %s784 = ssub.s32 %s13, 2
        // Predicated region
        $region45: #{nstep_deep_sarsa_forward.1} parent=43 // pred_check
          %p785 = pneg %p131
        $region46: #{nstep_deep_sarsa_forward.1} parent=43 // pred_check_branch
          %787 = sbr.rel (%p785) target = $region48
        $region47: #{nstep_deep_sarsa_forward.1} parent=43 // pred_region
          %s788 = sand.u32 %s116, 1
          %s789 = scalar_lea.sflag [#allocation3], %s788
          %s790 = sand.u32 %s116, 1
          %s791 = smul.addr %s790, 8
          %s792 = scalar_lea.vmem [#allocation2], %s791
          %793 = dma.done %s789, 128
        $region48: #{nstep_deep_sarsa_forward.1} parent=43 // pred_fallthru
          _
      $region44: #{nstep_deep_sarsa_forward.1} parent=5 // pred_fallthru
        _
    $region6: #{nstep_deep_sarsa_forward.1} parent=1 // loop_footer
      %s17 = sadd.s32 1, %s13
    $region7: #{nstep_deep_sarsa_forward.1} parent=1 // loop_footer_branch
      %12 = sbr.rel target = $region3
    $region8: #{nstep_deep_sarsa_forward.1} parent=1 // loop_exit
      _
    %794 = vsyncpa [#allocation3], 1
    %s795 = scalar_lea.sflag [#allocation3], 1
    %796 = vsyncpa %s795, 1

</llo_original>
